<compile_context>
chip_gen: v6e
topology: v6e:2x2x1
jax: 0.10.0
libtpu: 0.0.40
codegen_flags: <defaults>
</compile_context>

<pallas_src>
import jax
import jax.numpy as jnp
from jax.experimental import pallas as pl
from jax.experimental.pallas import tpu as pltpu

# ---------------- static problem configuration ----------------
B = 2                    # batch
C = 16                   # channels
RED = 4                  # reduction_ratio
C_R = C // RED           # 4
L = 128                  # seq_len (128 -> lane-dense stores)
BN_EPS = 1e-5            # PyTorch BatchNorm1d default eps

# ---------------- packed parameter layout (all blocks start on 8-aligned rows) ----------------
P_LANES = 128
N1 = B * C_R + B * 2 * C_R          # 24: fused stage-1 rows = [spatial hidden ; pooled hidden]
R_W1 = 0                            # (N1, B*C)        fused stage-1 weight  [wsp1 ; wp1]
R_B1 = 24                           # (N1, 128)        fused stage-1 bias (lane-replicated)
R_WSP2 = 48                         # (B*C, B*C_R)     spatial stage-2 weight, row-expanded per channel
R_BSP2 = 80                         # (B*C, 128)       spatial stage-2 bias (lane-replicated)
R_WP2 = 112                         # (2*B*C, B*2*C_R) pooled stage-2 weight [channel_att ; feature_w]
R_BP2 = 176                         # (2*B*C, 128)     pooled stage-2 bias (lane-replicated)
P_ROWS = 240


def _sigmoid(z):
    # tanh form: one EUP op, numerically robust for large |z|.
    return 0.5 * jnp.tanh(0.5 * z) + 0.5


# ---------------- the Pallas kernel ----------------
def _gating_kernel(x_ref, p_ref, o_ref):
    """x_ref: (B, C, L) f32; p_ref: (P_ROWS, 128) f32; o_ref: (B, C, L) f32."""
    x = x_ref[...]                                       # (B, C, L)
    xf = x.reshape(B * C, L)                             # (32, 128): free collapse of leading dims

    # ---- fused stage-1: one MXU matmul gives both spatial hidden and pooled hidden ----
    w1 = p_ref[R_W1:R_W1 + N1, 0:B * C]                  # (24, 32)
    b1 = p_ref[R_B1:R_B1 + N1, :]                        # (24, 128) lane-replicated bias
    m1 = jnp.dot(w1, xf, preferred_element_type=jnp.float32) + b1       # (24, 128)

    # spatial hidden: conv1x1 + folded BN, then ReLU
    s1 = jnp.maximum(m1[0:B * C_R, :], 0.0)              # (8, 128)

    # pooled hidden: mean over L commutes with the 1x1 conv + lane-constant bias
    pooled = jnp.mean(m1[B * C_R:N1, :], axis=1, keepdims=True)         # (16, 1)
    h = jnp.broadcast_to(jnp.maximum(pooled, 0.0), (B * 2 * C_R, L))    # (16, 128) lane-dense

    # ---- spatial gate stage-2: row-expanded weight -> sa already aligned with xf rows ----
    wsp2 = p_ref[R_WSP2:R_WSP2 + B * C, 0:B * C_R]       # (32, 8)
    bsp2 = p_ref[R_BSP2:R_BSP2 + B * C, :]               # (32, 128)
    sa = _sigmoid(jnp.dot(wsp2, s1, preferred_element_type=jnp.float32) + bsp2)   # (32, 128)

    # ---- pooled stage-2: rows [0,B*C) = channel_att, rows [B*C,2*B*C) = feature_weights ----
    wp2 = p_ref[R_WP2:R_WP2 + 2 * B * C, 0:B * 2 * C_R]  # (64, 16)
    bp2 = p_ref[R_BP2:R_BP2 + 2 * B * C, :]              # (64, 128)
    g = _sigmoid(jnp.dot(wp2, h, preferred_element_type=jnp.float32) + bp2)       # (64, 128)
    pg = g[0:B * C, :] * g[B * C:2 * B * C, :]            # (32, 128)

    # ---- apply the three gates; single lane-dense unmasked store ----
    o_ref[...] = (xf * sa * pg).reshape(B, C, L).astype(o_ref.dtype)


def fine_grained_gating_pallas(x, packed_params):
    """x: (B, C, L) f32, packed_params: (P_ROWS, 128) f32 -> (B, C, L) f32."""
    return pl.pallas_call(
        _gating_kernel,
        out_shape=jax.ShapeDtypeStruct((B, C, L), jnp.float32),
        in_specs=[
            pl.BlockSpec(memory_space=pltpu.MemorySpace.VMEM),
            pl.BlockSpec(memory_space=pltpu.MemorySpace.VMEM),
        ],
        out_specs=pl.BlockSpec(memory_space=pltpu.MemorySpace.VMEM),
    )(x, packed_params)


# ---------------- host-side parameter folding / packing ----------------
def _block_diag_tile(w, n):
    """Block-diagonal matrix with n copies of w along the diagonal."""
    r, c = w.shape
    out = jnp.zeros((n * r, n * c), w.dtype)
    for i in range(n):
        out = out.at[i * r:(i + 1) * r, i * c:(i + 1) * c].set(w)
    return out


def _rep_lanes(v):
    """Replicate a 1-D bias across all 128 lanes."""
    return jnp.broadcast_to(v[:, None], (v.shape[0], P_LANES))


def pack_params(cg_w1, cg_b1, cg_w2, cg_b2,
                sg_w1, sg_b1, bn_g, bn_b, bn_m, bn_v, sg_w2, sg_b2,
                sq_w1, sq_b1, sq_w2, sq_b2):
    # Fold eval-mode BatchNorm into the spatial-gate first conv.
    scale = bn_g / jnp.sqrt(bn_v + BN_EPS)
    w1f = sg_w1 * scale[:, None]
    b1f = (sg_b1 - bn_m) * scale + bn_b

    # Fused stage-1: rows 0:B*C_R spatial hidden (block-diag over batch),
    #                rows B*C_R:N1 pooled hidden [cg_w1; sq_w1] (block-diag over batch).
    wsp1 = _block_diag_tile(w1f, B)                      # (B*C_r, B*C)
    bsp1 = jnp.tile(b1f, B)                              # (B*C_r,)
    w1cat = jnp.concatenate([cg_w1, sq_w1], axis=0)      # (2*C_r, C)
    b1cat = jnp.concatenate([cg_b1, sq_b1], axis=0)      # (2*C_r,)
    wp1 = _block_diag_tile(w1cat, B)                     # (B*2*C_r, B*C)
    bp1 = jnp.tile(b1cat, B)                             # (B*2*C_r,)
    w1 = jnp.concatenate([wsp1, wp1], axis=0)            # (N1, B*C)
    b1 = jnp.concatenate([bsp1, bp1], axis=0)            # (N1,)

    # Spatial stage-2, row-expanded: one output row per (batch, channel), so the
    # result is row-aligned with the flattened input (no sublane broadcast later).
    wsp2 = jnp.zeros((B * C, B * C_R), jnp.float32)
    bsp2 = jnp.zeros((B * C,), jnp.float32)
    for b in range(B):
        wsp2 = wsp2.at[b * C:(b + 1) * C, b * C_R:(b + 1) * C_R].set(
            jnp.broadcast_to(sg_w2.reshape(1, C_R), (C, C_R)))
        bsp2 = bsp2.at[b * C:(b + 1) * C].set(sg_b2[0])

    # Pooled stage-2: output rows ordered [ca_b0, ca_b1, fw_b0, fw_b1].
    wp2 = jnp.zeros((2 * B * C, B * 2 * C_R), jnp.float32)
    bp2 = jnp.zeros((2 * B * C,), jnp.float32)
    for b in range(B):
        h0 = b * 2 * C_R
        wp2 = wp2.at[b * C:(b + 1) * C, h0:h0 + C_R].set(cg_w2)                    # channel_att
        bp2 = bp2.at[b * C:(b + 1) * C].set(cg_b2)
        wp2 = wp2.at[B * C + b * C:B * C + (b + 1) * C, h0 + C_R:h0 + 2 * C_R].set(sq_w2)  # feature_w
        bp2 = bp2.at[B * C + b * C:B * C + (b + 1) * C].set(sq_b2)

    p = jnp.zeros((P_ROWS, P_LANES), jnp.float32)
    p = p.at[R_W1:R_W1 + N1, 0:B * C].set(w1)
    p = p.at[R_B1:R_B1 + N1, :].set(_rep_lanes(b1))
    p = p.at[R_WSP2:R_WSP2 + B * C, 0:B * C_R].set(wsp2)
    p = p.at[R_BSP2:R_BSP2 + B * C, :].set(_rep_lanes(bsp2))
    p = p.at[R_WP2:R_WP2 + 2 * B * C, 0:B * 2 * C_R].set(wp2)
    p = p.at[R_BP2:R_BP2 + 2 * B * C, :].set(_rep_lanes(bp2))
    return p


# ---------------- pure-JAX reference (PyTorch semantics, eval-mode BN) ----------------
def reference_forward(x, cg_w1, cg_b1, cg_w2, cg_b2,
                      sg_w1, sg_b1, bn_g, bn_b, bn_m, bn_v, sg_w2, sg_b2,
                      sq_w1, sq_b1, sq_w2, sq_b2):
    # channel gate
    xp = jnp.mean(x, axis=2, keepdims=True)                                        # (B, C, 1)
    h = jax.nn.relu(jnp.einsum('oc,bcl->bol', cg_w1, xp) + cg_b1[None, :, None])
    channel_att = jax.nn.sigmoid(jnp.einsum('oc,bcl->bol', cg_w2, h) + cg_b2[None, :, None])
    # spatial gate
    s = jnp.einsum('oc,bcl->bol', sg_w1, x) + sg_b1[None, :, None]                 # (B, C_r, L)
    s = (s - bn_m[None, :, None]) / jnp.sqrt(bn_v[None, :, None] + BN_EPS) \
        * bn_g[None, :, None] + bn_b[None, :, None]
    s = jax.nn.relu(s)
    spatial_att = jax.nn.sigmoid(jnp.einsum('oc,bcl->bol', sg_w2, s) + sg_b2[None, :, None])  # (B, 1, L)
    # squeeze / feature weights
    x_avg = jnp.mean(x, axis=2)                                                    # (B, C)
    f = jax.nn.relu(x_avg @ sq_w1.T + sq_b1)
    f = f @ sq_w2.T + sq_b2
    feature_weights = jax.nn.sigmoid(f)[:, :, None]                                # (B, C, 1)
    return x * channel_att * spatial_att * feature_weights


if __name__ == "__main__":
    key = jax.random.PRNGKey(0)
    ks = jax.random.split(key, 17)
    x = jax.random.normal(ks[0], (B, C, L), dtype=jnp.float32)

    s = 0.3
    cg_w1 = s * jax.random.normal(ks[1], (C_R, C), jnp.float32)    # channel_gate conv1 (k=1)
    cg_b1 = s * jax.random.normal(ks[2], (C_R,), jnp.float32)
    cg_w2 = s * jax.random.normal(ks[3], (C, C_R), jnp.float32)    # channel_gate conv2 (k=1)
    cg_b2 = s * jax.random.normal(ks[4], (C,), jnp.float32)

    sg_w1 = s * jax.random.normal(ks[5], (C_R, C), jnp.float32)    # spatial_gate conv1 (k=1)
    sg_b1 = s * jax.random.normal(ks[6], (C_R,), jnp.float32)
    bn_g = 1.0 + 0.2 * jax.random.normal(ks[7], (C_R,), jnp.float32)
    bn_b = 0.2 * jax.random.normal(ks[8], (C_R,), jnp.float32)
    bn_m = 0.2 * jax.random.normal(ks[9], (C_R,), jnp.float32)
    bn_v = jax.random.uniform(ks[10], (C_R,), jnp.float32, 0.5, 1.5)
    sg_w2 = s * jax.random.normal(ks[11], (1, C_R), jnp.float32)   # spatial_gate conv2 (k=1)
    sg_b2 = s * jax.random.normal(ks[12], (1,), jnp.float32)

    sq_w1 = s * jax.random.normal(ks[13], (C_R, C), jnp.float32)   # squeeze Linear 1
    sq_b1 = s * jax.random.normal(ks[14], (C_R,), jnp.float32)
    sq_w2 = s * jax.random.normal(ks[15], (C, C_R), jnp.float32)   # squeeze Linear 2
    sq_b2 = s * jax.random.normal(ks[16], (C,), jnp.float32)

    packed = pack_params(cg_w1, cg_b1, cg_w2, cg_b2,
                         sg_w1, sg_b1, bn_g, bn_b, bn_m, bn_v, sg_w2, sg_b2,
                         sq_w1, sq_b1, sq_w2, sq_b2)

    out = fine_grained_gating_pallas(x, packed)
    out = jax.block_until_ready(out)

    ref = reference_forward(x, cg_w1, cg_b1, cg_w2, cg_b2,
                            sg_w1, sg_b1, bn_g, bn_b, bn_m, bn_v, sg_w2, sg_b2,
                            sq_w1, sq_b1, sq_w2, sq_b2)

    err = float(jnp.max(jnp.abs(out - ref)))
    assert err < 1e-4, f"mismatch vs reference: max abs err = {err}"
    print("KERNEL_OK")
</pallas_src>

<mosaic_0001>
module attributes {stable_mosaic.version = 11 : i64} {
  func.func @_gating_kernel(%arg0: memref<2x16x128xf32, #tpu.memory_space<vmem>>, %arg1: memref<240x128xf32, #tpu.memory_space<vmem>>, %arg2: memref<2x16x128xf32, #tpu.memory_space<vmem>>) attributes {dimension_semantics = [], scalar_prefetch = 0 : i64, scratch_operands = 0 : i64, tpu.core_type = #tpu.core_type<tc>} {
    %c0 = arith.constant 0 : index
    %c0_0 = arith.constant 0 : index
    %c0_1 = arith.constant 0 : index
    %0 = vector.load %arg0[%c0, %c0_0, %c0_1] : memref<2x16x128xf32, #tpu.memory_space<vmem>>, vector<2x16x128xf32>
    %1 = vector.shape_cast %0 : vector<2x16x128xf32> to vector<32x128xf32>
    %c0_2 = arith.constant 0 : index
    %c0_3 = arith.constant 0 : index
    %2 = vector.load %arg1[%c0_2, %c0_3] : memref<240x128xf32, #tpu.memory_space<vmem>>, vector<24x32xf32>
    %c24 = arith.constant 24 : index
    %c0_4 = arith.constant 0 : index
    %3 = vector.load %arg1[%c24, %c0_4] : memref<240x128xf32, #tpu.memory_space<vmem>>, vector<24x128xf32>
    %cst = arith.constant dense<0.000000e+00> : vector<24x128xf32>
    %4 = tpu.matmul %2, %1, %cst {dimension_numbers = #tpu.dot_dimension_numbers<[1], [0], [0], [1], [0, 0, 1, 1], [], []>} : vector<24x32xf32>, vector<32x128xf32>, vector<24x128xf32> -> vector<24x128xf32>
    %5 = arith.addf %4, %3 : vector<24x128xf32>
    %6 = vector.extract_strided_slice %5 {offsets = [0, 0], sizes = [8, 128], strides = [1, 1]} : vector<24x128xf32> to vector<8x128xf32>
    %cst_5 = arith.constant 0.000000e+00 : f32
    %7 = vector.broadcast %cst_5 : f32 to vector<8x128xf32>
    %8 = arith.maximumf %6, %7 : vector<8x128xf32>
    %9 = vector.extract_strided_slice %5 {offsets = [8, 0], sizes = [16, 128], strides = [1, 1]} : vector<24x128xf32> to vector<16x128xf32>
    %cst_6 = arith.constant dense<0.000000e+00> : vector<16xf32>
    %10 = vector.multi_reduction <add>, %9, %cst_6 [1] : vector<16x128xf32> to vector<16xf32>
    %11 = vector.shape_cast %10 : vector<16xf32> to vector<16x1xf32>
    %cst_7 = arith.constant 1.280000e+02 : f32
    %12 = vector.broadcast %cst_7 : f32 to vector<16x1xf32>
    %13 = arith.divf %11, %12 : vector<16x1xf32>
    %cst_8 = arith.constant 0.000000e+00 : f32
    %14 = vector.broadcast %cst_8 : f32 to vector<16x1xf32>
    %15 = arith.maximumf %13, %14 : vector<16x1xf32>
    %16 = vector.shape_cast %15 : vector<16x1xf32> to vector<16x1xf32>
    %17 = vector.broadcast %16 : vector<16x1xf32> to vector<16x128xf32>
    %c48 = arith.constant 48 : index
    %c0_9 = arith.constant 0 : index
    %18 = vector.load %arg1[%c48, %c0_9] : memref<240x128xf32, #tpu.memory_space<vmem>>, vector<32x8xf32>
    %c80 = arith.constant 80 : index
    %c0_10 = arith.constant 0 : index
    %19 = vector.load %arg1[%c80, %c0_10] : memref<240x128xf32, #tpu.memory_space<vmem>>, vector<32x128xf32>
    %cst_11 = arith.constant dense<0.000000e+00> : vector<32x128xf32>
    %20 = tpu.matmul %18, %8, %cst_11 {dimension_numbers = #tpu.dot_dimension_numbers<[1], [0], [0], [1], [0, 0, 1, 1], [], []>} : vector<32x8xf32>, vector<8x128xf32>, vector<32x128xf32> -> vector<32x128xf32>
    %21 = arith.addf %20, %19 : vector<32x128xf32>
    %cst_12 = arith.constant 5.000000e-01 : f32
    %22 = vector.broadcast %cst_12 : f32 to vector<32x128xf32>
    %23 = arith.mulf %22, %21 : vector<32x128xf32>
    %24 = math.tanh %23 : vector<32x128xf32>
    %cst_13 = arith.constant 5.000000e-01 : f32
    %25 = vector.broadcast %cst_13 : f32 to vector<32x128xf32>
    %26 = arith.mulf %25, %24 : vector<32x128xf32>
    %cst_14 = arith.constant 5.000000e-01 : f32
    %27 = vector.broadcast %cst_14 : f32 to vector<32x128xf32>
    %28 = arith.addf %26, %27 : vector<32x128xf32>
    %c112 = arith.constant 112 : index
    %c0_15 = arith.constant 0 : index
    %29 = vector.load %arg1[%c112, %c0_15] : memref<240x128xf32, #tpu.memory_space<vmem>>, vector<64x16xf32>
    %c176 = arith.constant 176 : index
    %c0_16 = arith.constant 0 : index
    %30 = vector.load %arg1[%c176, %c0_16] : memref<240x128xf32, #tpu.memory_space<vmem>>, vector<64x128xf32>
    %cst_17 = arith.constant dense<0.000000e+00> : vector<64x128xf32>
    %31 = tpu.matmul %29, %17, %cst_17 {dimension_numbers = #tpu.dot_dimension_numbers<[1], [0], [0], [1], [0, 0, 1, 1], [], []>} : vector<64x16xf32>, vector<16x128xf32>, vector<64x128xf32> -> vector<64x128xf32>
    %32 = arith.addf %31, %30 : vector<64x128xf32>
    %cst_18 = arith.constant 5.000000e-01 : f32
    %33 = vector.broadcast %cst_18 : f32 to vector<64x128xf32>
    %34 = arith.mulf %33, %32 : vector<64x128xf32>
    %35 = math.tanh %34 : vector<64x128xf32>
    %cst_19 = arith.constant 5.000000e-01 : f32
    %36 = vector.broadcast %cst_19 : f32 to vector<64x128xf32>
    %37 = arith.mulf %36, %35 : vector<64x128xf32>
    %cst_20 = arith.constant 5.000000e-01 : f32
    %38 = vector.broadcast %cst_20 : f32 to vector<64x128xf32>
    %39 = arith.addf %37, %38 : vector<64x128xf32>
    %40 = vector.extract_strided_slice %39 {offsets = [0, 0], sizes = [32, 128], strides = [1, 1]} : vector<64x128xf32> to vector<32x128xf32>
    %41 = vector.extract_strided_slice %39 {offsets = [32, 0], sizes = [32, 128], strides = [1, 1]} : vector<64x128xf32> to vector<32x128xf32>
    %42 = arith.mulf %40, %41 : vector<32x128xf32>
    %43 = arith.mulf %1, %28 : vector<32x128xf32>
    %44 = arith.mulf %43, %42 : vector<32x128xf32>
    %45 = vector.shape_cast %44 : vector<32x128xf32> to vector<2x16x128xf32>
    %c0_21 = arith.constant 0 : index
    %c0_22 = arith.constant 0 : index
    %c0_23 = arith.constant 0 : index
    %46 = vector.load %arg2[%c0_21, %c0_22, %c0_23] : memref<2x16x128xf32, #tpu.memory_space<vmem>>, vector<2x16x128xf32>
    tpu.vector_store %arg2[%c0_21, %c0_22, %c0_23], %45 {strides = array<i32>} : memref<2x16x128xf32, #tpu.memory_space<vmem>>, vector<2x16x128xf32>,
    return
  }
}

</mosaic_0001>

<llo_original>
// kernel: tpu_custom_call.1
$region0: #{tpu_custom_call.1}
  #allocation0 [shape = 'u32[]', space=smem, size = 0x4, offset = 0x4, fixed_abs, tag = 'smem constant byte address 0x4 - core index']
  #allocation1 [shape = 'u32[144,128]{1,0:T(1,128)}', space=vmem, size = 0x12000, scoped, tag = 'internal scratch']
  %s0 = inlined_call_operand.hbm [shape: f32[2,16,128], index: 0, kind: input, shape index: {}]
  %s1 = inlined_call_operand.hbm [shape: f32[240,128], index: 1, kind: input, shape index: {}]
  %s2 = inlined_call_operand.hbm [shape: f32[2,16,128], index: 2, kind: output, shape index: {}]
  %s3 = sld [smem:[#allocation0]]
  $region26: #{tpu_custom_call.1} parent=0
    _
  %s5 = ssub.s32 1, %s3
  %s6 = scalar_select 0, %s5, %s3
  $region1: #{tpu_custom_call.1} parent=0
    #allocation2 [shape = 'u8[16384]{0}', space=vmem, size = 0x4000, scoped, tag = 'input window, operand 0, single buffered']
    #allocation3 [shape = 's32[1]{0}', space=sflag, size = 0x4, scoped, tag = 'scoped memory for tpu_custom_call.1']
    #allocation4 [shape = 's32[1]{0}', space=sflag, size = 0x4, scoped, tag = 'scoped memory for tpu_custom_call.1']
    #allocation5 [shape = 'u8[122880]{0}', space=vmem, size = 0x1e000, scoped, tag = 'input window, operand 1, single buffered']
    #allocation6 [shape = 's32[1]{0}', space=sflag, size = 0x4, scoped, tag = 'scoped memory for tpu_custom_call.1']
    #allocation7 [shape = 'u8[16384]{0}', space=vmem, size = 0x4000, scoped, tag = 'output window, operand 0, single buffered']
    %7 = vsyncpa [#allocation3], 0
    %8 = vsyncpa [#allocation6], 0
    %9 = vsyncpa [#allocation4], 0
    // Predicated region
    $region2: #{tpu_custom_call.1} parent=1 // pred_check
      _
    $region3: #{tpu_custom_call.1} parent=1 // pred_check_branch
      %11 = sbr.rel (0) target = $region5
    $region4: #{tpu_custom_call.1} parent=1 // pred_region
      %s13 = ssub.s32 512, 512
      %14 = vsyncadd [#allocation3], %s13
      %s15 = sshll.u32 [#allocation2], 4
      %s16 = int_to_ptr.vmem [resolvable:$true] %s15
      %21 = dma.hbm_to_vmem [thread:$0]  %s0, 512, %s16, [#allocation3], 128, 128, 8
    $region5: #{tpu_custom_call.1} parent=1 // pred_fallthru
      _
    // Predicated region
    $region6: #{tpu_custom_call.1} parent=1 // pred_check
      _
    $region7: #{tpu_custom_call.1} parent=1 // pred_check_branch
      %23 = sbr.rel (0) target = $region9
    $region8: #{tpu_custom_call.1} parent=1 // pred_region
      %s25 = ssub.s32 3840, 3840
      %26 = vsyncadd [#allocation6], %s25
      %s27 = sshll.u32 [#allocation5], 4
      %s28 = int_to_ptr.vmem [resolvable:$true] %s27
      %33 = dma.hbm_to_vmem [thread:$0]  %s1, 3840, %s28, [#allocation6], 128, 128, 8
    $region9: #{tpu_custom_call.1} parent=1 // pred_fallthru
      _
    // Predicated region
    $region10: #{tpu_custom_call.1} parent=1 // pred_check
      _
    $region11: #{tpu_custom_call.1} parent=1 // pred_check_branch
      %35 = sbr.rel (0) target = $region13
    $region12: #{tpu_custom_call.1} parent=1 // pred_region
      %36 = dma.done [#allocation3], 512
    $region13: #{tpu_custom_call.1} parent=1 // pred_fallthru
      _
    // Predicated region
    $region14: #{tpu_custom_call.1} parent=1 // pred_check
      _
    $region15: #{tpu_custom_call.1} parent=1 // pred_check_branch
      %38 = sbr.rel (0) target = $region17
    $region16: #{tpu_custom_call.1} parent=1 // pred_region
      %39 = dma.done [#allocation6], 3840
    $region17: #{tpu_custom_call.1} parent=1 // pred_fallthru
      _
    %v40 = vld [vmem:[#allocation2] sm:$0xff]
    %v41 = vld [vmem:[#allocation2 + $0x8] sm:$0xff]
    %v42 = vld [vmem:[#allocation2 + $0x10] sm:$0xff]
    %v43 = vld [vmem:[#allocation2 + $0x18] sm:$0xff]
    %v44 = vld [vmem:[#allocation5] sm:$0xff]
    %v45 = vld [vmem:[#allocation5 + $0x8] sm:$0xff]
    %v46 = vld [vmem:[#allocation5 + $0x10] sm:$0xff]
    %v47 = vld [vmem:[#allocation5 + $0x18] sm:$0xff]
    %v48 = vld [vmem:[#allocation5 + $0x20] sm:$0xff]
    %v49 = vld [vmem:[#allocation5 + $0x28] sm:$0xff]
    %vm50 = vcmask 261120
    %v52 = vsel %vm50, %v44, 0
    %v55 = vsel %vm50, %v45, 0
    %v58 = vsel %vm50, %v46, 0
    %60 = vmatprep.subr.mxu0 0.0
    %61 = vmatpush1.msra.mxu0 0.0
    %62 = vmatprep.subr.mxu0 0.0
    %63 = vmatpush1.msra.mxu0 0.0
    %64 = vmatprep.subr.mxu0 0.0
    %65 = vmatpush1.msra.mxu0 0.0
    %66 = vmatprep.subr.mxu0 0.0
    %67 = vmatpush1.msra.mxu0 0.0
    %68 = vmatprep.subr.mxu0 0.0
    %69 = vmatpush1.msra.mxu0 0.0
    %70 = vmatprep.subr.mxu0 0.0
    %71 = vmatpush1.msra.mxu0 0.0
    %72 = vmatprep.subr.mxu0 0.0
    %73 = vmatpush1.msra.mxu0 0.0
    %74 = vmatprep.subr.mxu0 0.0
    %75 = vmatpush1.msra.mxu0 0.0
    %76 = vmatprep.subr.mxu0 0.0
    %77 = vmatpush1.msra.mxu0 0.0
    %78 = vmatprep.subr.mxu0 0.0
    %79 = vmatpush1.msra.mxu0 0.0
    %80 = vmatprep.subr.mxu0 0.0
    %81 = vmatpush1.msra.mxu0 0.0
    %82 = vmatprep.subr.mxu0 0.0
    %83 = vmatpush1.msra.mxu0 0.0
    %84 = vmatprep.subr.mxu0 0.0
    %85 = vmatpush1.msra.mxu0 %v43
    %86 = vmatprep.subr.mxu0 0.0
    %87 = vmatpush1.msra.mxu0 %v42
    %88 = vmatprep.subr.mxu0 0.0
    %89 = vmatpush1.msra.mxu0 %v41
    %90 = vmatprep.subr.mxu0 0.0
    %91 = vmatpush1.msra.mxu0 %v40
    %92 = vmatprep.subr.mxu0 0.0
    %93 = vmatpush2.msra.mxu0 0.0
    %94 = vmatprep.subr.mxu0 0.0
    %95 = vmatpush2.msra.mxu0 0.0
    %96 = vmatprep.subr.mxu0 0.0
    %97 = vmatpush2.msra.mxu0 0.0
    %98 = vmatprep.subr.mxu0 0.0
    %99 = vmatpush2.msra.mxu0 0.0
    %100 = vmatprep.subr.mxu0 0.0
    %101 = vmatpush2.msra.mxu0 0.0
    %102 = vmatprep.subr.mxu0 0.0
    %103 = vmatpush2.msra.mxu0 0.0
    %104 = vmatprep.subr.mxu0 0.0
    %105 = vmatpush2.msra.mxu0 0.0
    %106 = vmatprep.subr.mxu0 0.0
    %107 = vmatpush2.msra.mxu0 0.0
    %108 = vmatprep.subr.mxu0 0.0
    %109 = vmatpush2.msra.mxu0 0.0
    %110 = vmatprep.subr.mxu0 0.0
    %111 = vmatpush2.msra.mxu0 0.0
    %112 = vmatprep.subr.mxu0 0.0
    %113 = vmatpush2.msra.mxu0 0.0
    %114 = vmatprep.subr.mxu0 0.0
    %115 = vmatpush2.msra.mxu0 0.0
    %116 = vmatprep.subr.mxu0 0.0
    %117 = vmatpush2.msra.mxu0 0.0
    %118 = vmatprep.subr.mxu0 0.0
    %119 = vmatpush2.msra.mxu0 0.0
    %120 = vmatprep.subr.mxu0 0.0
    %121 = vmatpush2.msra.mxu0 0.0
    %122 = vmatprep.subr.mxu0 0.0
    %123 = vmatpush2.msra.mxu0 0.0
    %124 = vmatprep.mubr.f32.mxu0 0.0
    %125 = vmatmul.mubr.f32.gmra.mxu0 %v52
    %v126 = vpop.f32.mrf.mxu0
    %v127 = vadd.f32 %v47, %v126
    %v128 = vpop.f32.mrf.mxu0
    %129 = vmatprep.mubr.f32.mxu0 0.0
    %130 = vmatmul.mubr.f32.gmra.mxu0 %v55
    %v131 = vpop.f32.mrf.mxu0
    %v132 = vadd.f32 %v48, %v131
    %v133 = vpop.f32.mrf.mxu0
    %134 = vmatprep.mubr.f32.mxu0 0.0
    %135 = vmatmul.mubr.f32.gmra.mxu0 %v58
    %v136 = vpop.f32.mrf.mxu0
    %v137 = vadd.f32 %v49, %v136
    %v138 = vpop.f32.mrf.mxu0
    %139 = vdwg.mxu0
    %v140 = vmax.f32 %v127, 0.0
    %141 = vadd.xlane.f32.xlu0 %v132
    %v142 = vpop.xlane.xlu0 %141
    %143 = vadd.xlane.f32.xlu0 %v137
    %v144 = vpop.xlane.xlu0 %143
    %v145 = vrcp.pop 128.0
    %v146 = vmul.f32 %v142, %v145
    %v147 = vmul.f32 %v144, %v145
    %v148 = vmax.f32 %v146, 0.0
    %v149 = vmax.f32 %v147, 0.0
    %v150 = vld [vmem:[#allocation5 + $0x30] sm:$0xff]
    %v151 = vld [vmem:[#allocation5 + $0x38] sm:$0xff]
    %v152 = vld [vmem:[#allocation5 + $0x40] sm:$0xff]
    %v153 = vld [vmem:[#allocation5 + $0x48] sm:$0xff]
    %v154 = vld [vmem:[#allocation5 + $0x50] sm:$0xff]
    %v155 = vld [vmem:[#allocation5 + $0x58] sm:$0xff]
    %v156 = vld [vmem:[#allocation5 + $0x60] sm:$0xff]
    %v157 = vld [vmem:[#allocation5 + $0x68] sm:$0xff]
    %vm158 = vcmask 64512
    %v160 = vsel %vm158, %v150, 0
    %v163 = vsel %vm158, %v151, 0
    %v166 = vsel %vm158, %v152, 0
    %v169 = vsel %vm158, %v153, 0
    %171 = vmatprep.subr.mxu0 0.0
    %172 = vmatpush1.msra.mxu0 0.0
    %173 = vmatprep.subr.mxu0 0.0
    %174 = vmatpush1.msra.mxu0 0.0
    %175 = vmatprep.subr.mxu0 0.0
    %176 = vmatpush1.msra.mxu0 0.0
    %177 = vmatprep.subr.mxu0 0.0
    %178 = vmatpush1.msra.mxu0 0.0
    %179 = vmatprep.subr.mxu0 0.0
    %180 = vmatpush1.msra.mxu0 0.0
    %181 = vmatprep.subr.mxu0 0.0
    %182 = vmatpush1.msra.mxu0 0.0
    %183 = vmatprep.subr.mxu0 0.0
    %184 = vmatpush1.msra.mxu0 0.0
    %185 = vmatprep.subr.mxu0 0.0
    %186 = vmatpush1.msra.mxu0 0.0
    %187 = vmatprep.subr.mxu0 0.0
    %188 = vmatpush1.msra.mxu0 0.0
    %189 = vmatprep.subr.mxu0 0.0
    %190 = vmatpush1.msra.mxu0 0.0
    %191 = vmatprep.subr.mxu0 0.0
    %192 = vmatpush1.msra.mxu0 0.0
    %193 = vmatprep.subr.mxu0 0.0
    %194 = vmatpush1.msra.mxu0 0.0
    %195 = vmatprep.subr.mxu0 0.0
    %196 = vmatpush1.msra.mxu0 0.0
    %197 = vmatprep.subr.mxu0 0.0
    %198 = vmatpush1.msra.mxu0 0.0
    %199 = vmatprep.subr.mxu0 0.0
    %200 = vmatpush1.msra.mxu0 0.0
    %201 = vmatprep.subr.mxu0 0.0
    %202 = vmatpush1.msra.mxu0 %v140
    %203 = vmatprep.subr.mxu0 0.0
    %204 = vmatpush2.msra.mxu0 0.0
    %205 = vmatprep.subr.mxu0 0.0
    %206 = vmatpush2.msra.mxu0 0.0
    %207 = vmatprep.subr.mxu0 0.0
    %208 = vmatpush2.msra.mxu0 0.0
    %209 = vmatprep.subr.mxu0 0.0
    %210 = vmatpush2.msra.mxu0 0.0
    %211 = vmatprep.subr.mxu0 0.0
    %212 = vmatpush2.msra.mxu0 0.0
    %213 = vmatprep.subr.mxu0 0.0
    %214 = vmatpush2.msra.mxu0 0.0
    %215 = vmatprep.subr.mxu0 0.0
    %216 = vmatpush2.msra.mxu0 0.0
    %217 = vmatprep.subr.mxu0 0.0
    %218 = vmatpush2.msra.mxu0 0.0
    %219 = vmatprep.subr.mxu0 0.0
    %220 = vmatpush2.msra.mxu0 0.0
    %221 = vmatprep.subr.mxu0 0.0
    %222 = vmatpush2.msra.mxu0 0.0
    %223 = vmatprep.subr.mxu0 0.0
    %224 = vmatpush2.msra.mxu0 0.0
    %225 = vmatprep.subr.mxu0 0.0
    %226 = vmatpush2.msra.mxu0 0.0
    %227 = vmatprep.subr.mxu0 0.0
    %228 = vmatpush2.msra.mxu0 0.0
    %229 = vmatprep.subr.mxu0 0.0
    %230 = vmatpush2.msra.mxu0 0.0
    %231 = vmatprep.subr.mxu0 0.0
    %232 = vmatpush2.msra.mxu0 0.0
    %233 = vmatprep.subr.mxu0 0.0
    %234 = vmatpush2.msra.mxu0 0.0
    %235 = vmatprep.mubr.f32.mxu0 0.0
    %236 = vmatmul.mubr.f32.gmra.mxu0 %v160
    %v237 = vpop.f32.mrf.mxu0
    %v238 = vadd.f32 %v154, %v237
    %v239 = vpop.f32.mrf.mxu0
    %240 = vmatprep.mubr.f32.mxu0 0.0
    %241 = vmatmul.mubr.f32.gmra.mxu0 %v163
    %v242 = vpop.f32.mrf.mxu0
    %v243 = vadd.f32 %v155, %v242
    %v244 = vpop.f32.mrf.mxu0
    %245 = vmatprep.mubr.f32.mxu0 0.0
    %246 = vmatmul.mubr.f32.gmra.mxu0 %v166
    %v247 = vpop.f32.mrf.mxu0
    %v248 = vadd.f32 %v156, %v247
    %v249 = vpop.f32.mrf.mxu0
    %250 = vmatprep.mubr.f32.mxu0 0.0
    %251 = vmatmul.mubr.f32.gmra.mxu0 %v169
    %v252 = vpop.f32.mrf.mxu0
    %v253 = vadd.f32 %v157, %v252
    %v254 = vpop.f32.mrf.mxu0
    %255 = vdwg.mxu0
    %v256 = vmul.f32 %v238, 0.5
    %v257 = vmul.f32 %v243, 0.5
    %v258 = vmul.f32 %v248, 0.5
    %v259 = vmul.f32 %v253, 0.5
    %v260 = vtanh.pop %v256
    %v261 = vtanh.pop %v257
    %v262 = vtanh.pop %v258
    %v263 = vtanh.pop %v259
    %v264 = vmul.f32 %v260, 0.5
    %v265 = vmul.f32 %v261, 0.5
    %v266 = vmul.f32 %v262, 0.5
    %v267 = vmul.f32 %v263, 0.5
    %v268 = vadd.f32 %v264, 0.5
    %v269 = vadd.f32 %v265, 0.5
    %v270 = vadd.f32 %v266, 0.5
    %v271 = vadd.f32 %v267, 0.5
    %v272 = vld [vmem:[#allocation5 + $0x70] sm:$0xff]
    %v273 = vld [vmem:[#allocation5 + $0x78] sm:$0xff]
    %v274 = vld [vmem:[#allocation5 + $0x80] sm:$0xff]
    %v275 = vld [vmem:[#allocation5 + $0x88] sm:$0xff]
    %v276 = vld [vmem:[#allocation5 + $0x90] sm:$0xff]
    %v277 = vld [vmem:[#allocation5 + $0x98] sm:$0xff]
    %v278 = vld [vmem:[#allocation5 + $0xa0] sm:$0xff]
    %v279 = vld [vmem:[#allocation5 + $0xa8] sm:$0xff]
    %v280 = vld [vmem:[#allocation5 + $0xb0] sm:$0xff]
    %v281 = vld [vmem:[#allocation5 + $0xb8] sm:$0xff]
    %v282 = vld [vmem:[#allocation5 + $0xc0] sm:$0xff]
    %v283 = vld [vmem:[#allocation5 + $0xc8] sm:$0xff]
    %v284 = vld [vmem:[#allocation5 + $0xd0] sm:$0xff]
    %v285 = vld [vmem:[#allocation5 + $0xd8] sm:$0xff]
    %v286 = vld [vmem:[#allocation5 + $0xe0] sm:$0xff]
    %v287 = vld [vmem:[#allocation5 + $0xe8] sm:$0xff]
    %vm288 = vcmask 130048
    %v290 = vsel %vm288, %v272, 0
    %v293 = vsel %vm288, %v273, 0
    %v296 = vsel %vm288, %v274, 0
    %v299 = vsel %vm288, %v275, 0
    %v302 = vsel %vm288, %v276, 0
    %v305 = vsel %vm288, %v277, 0
    %v308 = vsel %vm288, %v278, 0
    %v311 = vsel %vm288, %v279, 0
    %313 = vmatprep.subr.mxu0 0.0
    %314 = vmatpush1.msra.mxu0 0.0
    %315 = vmatprep.subr.mxu0 0.0
    %316 = vmatpush1.msra.mxu0 0.0
    %317 = vmatprep.subr.mxu0 0.0
    %318 = vmatpush1.msra.mxu0 0.0
    %319 = vmatprep.subr.mxu0 0.0
    %320 = vmatpush1.msra.mxu0 0.0
    %321 = vmatprep.subr.mxu0 0.0
    %322 = vmatpush1.msra.mxu0 0.0
    %323 = vmatprep.subr.mxu0 0.0
    %324 = vmatpush1.msra.mxu0 0.0
    %325 = vmatprep.subr.mxu0 0.0
    %326 = vmatpush1.msra.mxu0 0.0
    %327 = vmatprep.subr.mxu0 0.0
    %328 = vmatpush1.msra.mxu0 0.0
    %329 = vmatprep.subr.mxu0 0.0
    %330 = vmatpush1.msra.mxu0 0.0
    %331 = vmatprep.subr.mxu0 0.0
    %332 = vmatpush1.msra.mxu0 0.0
    %333 = vmatprep.subr.mxu0 0.0
    %334 = vmatpush1.msra.mxu0 0.0
    %335 = vmatprep.subr.mxu0 0.0
    %336 = vmatpush1.msra.mxu0 0.0
    %337 = vmatprep.subr.mxu0 0.0
    %338 = vmatpush1.msra.mxu0 0.0
    %339 = vmatprep.subr.mxu0 0.0
    %340 = vmatpush1.msra.mxu0 0.0
    %341 = vmatprep.subr.mxu0 0.0
    %342 = vmatpush1.msra.mxu0 %v149
    %343 = vmatprep.subr.mxu0 0.0
    %344 = vmatpush1.msra.mxu0 %v148
    %345 = vmatprep.subr.mxu0 0.0
    %346 = vmatpush2.msra.mxu0 0.0
    %347 = vmatprep.subr.mxu0 0.0
    %348 = vmatpush2.msra.mxu0 0.0
    %349 = vmatprep.subr.mxu0 0.0
    %350 = vmatpush2.msra.mxu0 0.0
    %351 = vmatprep.subr.mxu0 0.0
    %352 = vmatpush2.msra.mxu0 0.0
    %353 = vmatprep.subr.mxu0 0.0
    %354 = vmatpush2.msra.mxu0 0.0
    %355 = vmatprep.subr.mxu0 0.0
    %356 = vmatpush2.msra.mxu0 0.0
    %357 = vmatprep.subr.mxu0 0.0
    %358 = vmatpush2.msra.mxu0 0.0
    %359 = vmatprep.subr.mxu0 0.0
    %360 = vmatpush2.msra.mxu0 0.0
    %361 = vmatprep.subr.mxu0 0.0
    %362 = vmatpush2.msra.mxu0 0.0
    %363 = vmatprep.subr.mxu0 0.0
    %364 = vmatpush2.msra.mxu0 0.0
    %365 = vmatprep.subr.mxu0 0.0
    %366 = vmatpush2.msra.mxu0 0.0
    %367 = vmatprep.subr.mxu0 0.0
    %368 = vmatpush2.msra.mxu0 0.0
    %369 = vmatprep.subr.mxu0 0.0
    %370 = vmatpush2.msra.mxu0 0.0
    %371 = vmatprep.subr.mxu0 0.0
    %372 = vmatpush2.msra.mxu0 0.0
    %373 = vmatprep.subr.mxu0 0.0
    %374 = vmatpush2.msra.mxu0 0.0
    %375 = vmatprep.subr.mxu0 0.0
    %376 = vmatpush2.msra.mxu0 0.0
    %377 = vmatprep.mubr.f32.mxu0 0.0
    %378 = vmatmul.mubr.f32.gmra.mxu0 %v290
    %v379 = vpop.f32.mrf.mxu0
    %v380 = vadd.f32 %v280, %v379
    %v381 = vpop.f32.mrf.mxu0
    %382 = vmatprep.mubr.f32.mxu0 0.0
    %383 = vmatmul.mubr.f32.gmra.mxu0 %v293
    %v384 = vpop.f32.mrf.mxu0
    %v385 = vadd.f32 %v281, %v384
    %v386 = vpop.f32.mrf.mxu0
    %387 = vmatprep.mubr.f32.mxu0 0.0
    %388 = vmatmul.mubr.f32.gmra.mxu0 %v296
    %v389 = vpop.f32.mrf.mxu0
    %v390 = vadd.f32 %v282, %v389
    %v391 = vpop.f32.mrf.mxu0
    %392 = vmatprep.mubr.f32.mxu0 0.0
    %393 = vmatmul.mubr.f32.gmra.mxu0 %v299
    %v394 = vpop.f32.mrf.mxu0
    %v395 = vadd.f32 %v283, %v394
    %v396 = vpop.f32.mrf.mxu0
    %397 = vmatprep.mubr.f32.mxu0 0.0
    %398 = vmatmul.mubr.f32.gmra.mxu0 %v302
    %v399 = vpop.f32.mrf.mxu0
    %v400 = vadd.f32 %v284, %v399
    %v401 = vpop.f32.mrf.mxu0
    %402 = vmatprep.mubr.f32.mxu0 0.0
    %403 = vmatmul.mubr.f32.gmra.mxu0 %v305
    %v404 = vpop.f32.mrf.mxu0
    %v405 = vadd.f32 %v285, %v404
    %v406 = vpop.f32.mrf.mxu0
    %407 = vmatprep.mubr.f32.mxu0 0.0
    %408 = vmatmul.mubr.f32.gmra.mxu0 %v308
    %v409 = vpop.f32.mrf.mxu0
    %v410 = vadd.f32 %v286, %v409
    %v411 = vpop.f32.mrf.mxu0
    %412 = vmatprep.mubr.f32.mxu0 0.0
    %413 = vmatmul.mubr.f32.gmra.mxu0 %v311
    %v414 = vpop.f32.mrf.mxu0
    %v415 = vadd.f32 %v287, %v414
    %v416 = vpop.f32.mrf.mxu0
    %417 = vdwg.mxu0
    %v418 = vmul.f32 %v380, 0.5
    %v419 = vmul.f32 %v385, 0.5
    %v420 = vmul.f32 %v390, 0.5
    %v421 = vmul.f32 %v395, 0.5
    %v422 = vmul.f32 %v400, 0.5
    %v423 = vmul.f32 %v405, 0.5
    %v424 = vmul.f32 %v410, 0.5
    %v425 = vmul.f32 %v415, 0.5
    %v426 = vtanh.pop %v418
    %v427 = vtanh.pop %v419
    %v428 = vtanh.pop %v420
    %v429 = vtanh.pop %v421
    %v430 = vtanh.pop %v422
    %v431 = vtanh.pop %v423
    %v432 = vtanh.pop %v424
    %v433 = vtanh.pop %v425
    %v434 = vmul.f32 %v426, 0.5
    %v435 = vmul.f32 %v427, 0.5
    %v436 = vmul.f32 %v428, 0.5
    %v437 = vmul.f32 %v429, 0.5
    %v438 = vmul.f32 %v430, 0.5
    %v439 = vmul.f32 %v431, 0.5
    %v440 = vmul.f32 %v432, 0.5
    %v441 = vmul.f32 %v433, 0.5
    %v442 = vadd.f32 %v434, 0.5
    %v443 = vadd.f32 %v435, 0.5
    %v444 = vadd.f32 %v436, 0.5
    %v445 = vadd.f32 %v437, 0.5
    %v446 = vadd.f32 %v438, 0.5
    %v447 = vadd.f32 %v439, 0.5
    %v448 = vadd.f32 %v440, 0.5
    %v449 = vadd.f32 %v441, 0.5
    %v450 = vmul.f32 %v442, %v446
    %v451 = vmul.f32 %v443, %v447
    %v452 = vmul.f32 %v444, %v448
    %v453 = vmul.f32 %v445, %v449
    %v454 = vmul.f32 %v40, %v268
    %v455 = vmul.f32 %v41, %v269
    %v456 = vmul.f32 %v42, %v270
    %v457 = vmul.f32 %v43, %v271
    %v458 = vmul.f32 %v454, %v450
    %v459 = vmul.f32 %v455, %v451
    %v460 = vmul.f32 %v456, %v452
    %v461 = vmul.f32 %v457, %v453
    %462 = vst [vmem:[#allocation7] sm:$0xff] %v458
    %463 = vst [vmem:[#allocation7 + $0x8] sm:$0xff] %v459
    %464 = vst [vmem:[#allocation7 + $0x10] sm:$0xff] %v460
    %465 = vst [vmem:[#allocation7 + $0x18] sm:$0xff] %v461
    // Predicated region
    $region18: #{tpu_custom_call.1} parent=1 // pred_check
      _
    $region19: #{tpu_custom_call.1} parent=1 // pred_check_branch
      %467 = sbr.rel (0) target = $region21
    $region20: #{tpu_custom_call.1} parent=1 // pred_region
      %s469 = ssub.s32 512, 512
      %470 = vsyncadd [#allocation4], %s469
      %s471 = sshll.u32 [#allocation7], 4
      %s472 = int_to_ptr.vmem [resolvable:$true] %s471
      %477 = dma.vmem_to_hbm [thread:$0]  %s472, 512, %s2, [#allocation4], 128, 128, 8
    $region21: #{tpu_custom_call.1} parent=1 // pred_fallthru
      _
    // Predicated region
    $region22: #{tpu_custom_call.1} parent=1 // pred_check
      _
    $region23: #{tpu_custom_call.1} parent=1 // pred_check_branch
      %479 = sbr.rel (0) target = $region25
    $region24: #{tpu_custom_call.1} parent=1 // pred_region
      %480 = dma.done [#allocation4], 512
    $region25: #{tpu_custom_call.1} parent=1 // pred_fallthru
      _
    %481 = vsyncpa [#allocation3], 1
    %482 = vsyncpa [#allocation6], 1
    %483 = vsyncpa [#allocation4], 1

</llo_original>
